<compile_context>
chip_gen: v7x
topology: tpu7x:2x2x1
jax: 0.10.0
libtpu: 0.0.40
codegen_flags: <defaults>
</compile_context>

<pallas_src>
import functools

import jax
import jax.numpy as jnp
from jax.experimental import pallas as pl
from jax.experimental.pallas import tpu as pltpu


def _ohkm_mse_kernel(*refs, topk, n_pixels, use_target_weight):
    if use_target_weight:
        pred_ref, tgt_ref, w_ref, out_ref, acc_ref = refs
    else:
        pred_ref, tgt_ref, out_ref, acc_ref = refs
        w_ref = None

    p_step = pl.program_id(1)

    @pl.when(p_step == 0)
    def _():
        acc_ref[...] = jnp.zeros_like(acc_ref)

    # Accumulate unweighted sum of squared diffs over this P-chunk.
    pred = pred_ref[...].astype(jnp.float32)        # (Bt, J, Pc)
    gt = tgt_ref[...].astype(jnp.float32)           # (Bt, J, Pc)
    diff = pred - gt
    acc_ref[...] += jnp.sum(diff * diff, axis=2)    # (Bt, J)

    @pl.when(p_step == pl.num_programs(1) - 1)
    def _():
        # Per-joint loss: 0.5 * w^2 * mean_p(diff^2)  (weight factored out of
        # the per-pixel path; applied once on the tiny (Bt, J) result).
        per_joint = acc_ref[...] * (0.5 / n_pixels)          # (Bt, J)
        if use_target_weight:
            w = w_ref[...].astype(jnp.float32)               # (Bt, J)
            per_joint = per_joint * (w * w)

        bt, j = per_joint.shape
        col = jax.lax.broadcasted_iota(jnp.int32, (bt, j), 1)

        # Online hard keypoint mining: peel off the per-row maximum `topk`
        # times, masking exactly the FIRST argmax each iteration (tie-safe,
        # matches top_k / PyTorch semantics).
        losses = per_joint
        total = jnp.zeros((bt, 1), jnp.float32)
        for _ in range(topk):
            m = jnp.max(losses, axis=1, keepdims=True)       # (Bt, 1)
            total = total + m
            is_max = losses == m
            first_idx = jnp.min(jnp.where(is_max, col, j), axis=1,
                                keepdims=True)
            losses = jnp.where(col == first_idx, -jnp.inf, losses)

        out_ref[...] = total                                  # (Bt, 1)


def _choose_tiles(B, J, P, itemsize, target_bytes):
    """Pick (Bt, Pc) so a single heatmap block stays <= target_bytes.

    TPU (8,128) rule on the last-two dims of every operand's block:
      * J is always kept at full extent (it is the lane dim of the weight
        block and the sublane dim of the heatmap block).
      * Bt is either B (full extent) or a multiple of 8 dividing B (it is the
        second-minor dim of the (Bt, J) weight block and (Bt, 1) out block).
      * Pc is either P (full extent) or a multiple of 128 dividing P.
    """
    bt_cands = sorted({b for b in range(8, B + 1, 8) if B % b == 0} | {B})
    pc_cands = sorted({p for p in range(128, P + 1, 128) if P % p == 0} | {P},
                      reverse=True)
    for pc in pc_cands:          # prefer lane-contiguous (large) P chunks
        for bt in bt_cands:      # prefer small batch tiles -> more parallel steps
            if bt * J * pc * itemsize <= target_bytes:
                return bt, pc
    # Nothing fits the target: use the smallest legal block anyway.
    return bt_cands[0], pc_cands[-1]


def joints_ohkm_mse_loss(output, target, target_weight=None, *,
                         use_target_weight=True, topk=8,
                         block_bytes=2 << 20):
    """output/target: (B, J, H, W); target_weight: (B, J, 1). Returns scalar."""
    B, J, H, W = output.shape
    P = H * W
    if topk > J:
        raise ValueError(f"topk={topk} must be <= num_joints={J}")

    out_f = output.reshape(B, J, P)
    tgt_f = target.reshape(B, J, P)

    itemsize = jnp.dtype(output.dtype).itemsize
    Bt, Pc = _choose_tiles(B, J, P, itemsize, block_bytes)
    n_btiles = B // Bt
    n_pchunks = P // Pc

    hm_spec = pl.BlockSpec((Bt, J, Pc), lambda bi, pi: (bi, 0, pi))
    in_specs = [hm_spec, hm_spec]
    args = [out_f, tgt_f]
    if use_target_weight:
        w = target_weight.reshape(B, J)
        in_specs.append(pl.BlockSpec((Bt, J), lambda bi, pi: (bi, 0)))
        args.append(w)

    kernel = functools.partial(
        _ohkm_mse_kernel, topk=topk, n_pixels=P,
        use_target_weight=use_target_weight)

    per_sample = pl.pallas_call(
        kernel,
        out_shape=jax.ShapeDtypeStruct((B, 1), jnp.float32),
        grid_spec=pltpu.PrefetchScalarGridSpec(
            num_scalar_prefetch=0,
            grid=(n_btiles, n_pchunks),
            in_specs=in_specs,
            out_specs=pl.BlockSpec((Bt, 1), lambda bi, pi: (bi, 0)),
            scratch_shapes=[pltpu.VMEM((Bt, J), jnp.float32)]),
        compiler_params=pltpu.CompilerParams(
            dimension_semantics=("parallel", "arbitrary")),
    )(*args)

    # Final tiny reduction: mean over batch of (topk-sum / topk).
    return jnp.sum(per_sample) / jnp.float32(topk * B)


def _reference(output, target, target_weight, use_target_weight=True, topk=8):
    # Pure-JAX reference mirroring the PyTorch module.
    B, J = output.shape[:2]
    pred = output.reshape(B, J, -1).astype(jnp.float32)
    gt = target.reshape(B, J, -1).astype(jnp.float32)
    if use_target_weight:
        w = target_weight.reshape(B, J, 1).astype(jnp.float32)
        pred = pred * w
        gt = gt * w
    l = 0.5 * jnp.mean((pred - gt) ** 2, axis=-1)        # (B, J)
    topv, _ = jax.lax.top_k(l, topk)
    return jnp.mean(jnp.sum(topv, axis=1) / topk)


if __name__ == "__main__":
    key = jax.random.PRNGKey(0)
    k1, k2, k3 = jax.random.split(key, 3)

    B, J, H, W = 2, 16, 16, 16     # batch=2, 16 joints, 16x16 heatmaps
    topk = 8

    output = jax.random.normal(k1, (B, J, H, W), dtype=jnp.float32)
    target = jax.random.normal(k2, (B, J, H, W), dtype=jnp.float32)
    target_weight = jax.random.uniform(k3, (B, J, 1), dtype=jnp.float32)

    # 1) Weighted path, single-tile grid.
    loss = joints_ohkm_mse_loss(output, target, target_weight,
                                use_target_weight=True, topk=topk)
    loss = jax.block_until_ready(loss)
    ref = _reference(output, target, target_weight, True, topk)
    assert jnp.allclose(loss, ref, rtol=1e-5, atol=1e-6), (loss, ref)

    # 2) Unweighted path (weight array not passed / not DMA'd).
    loss_nw = joints_ohkm_mse_loss(output, target, None,
                                   use_target_weight=False, topk=topk)
    loss_nw = jax.block_until_ready(loss_nw)
    ref_nw = _reference(output, target, target_weight, False, topk)
    assert jnp.allclose(loss_nw, ref_nw, rtol=1e-5, atol=1e-6), (loss_nw, ref_nw)

    # 3) Multi-tile grid: larger batch + tiny block budget forces batch tiling
    #    and a multi-step P reduction (exercises the scratch accumulator path).
    kb1, kb2, kb3 = jax.random.split(jax.random.PRNGKey(1), 3)
    Bb = 16
    out_b = jax.random.normal(kb1, (Bb, J, H, W), dtype=jnp.float32)
    tgt_b = jax.random.normal(kb2, (Bb, J, H, W), dtype=jnp.float32)
    w_b = jax.random.uniform(kb3, (Bb, J, 1), dtype=jnp.float32)
    loss_b = joints_ohkm_mse_loss(out_b, tgt_b, w_b, use_target_weight=True,
                                  topk=topk, block_bytes=16 * 1024)
    loss_b = jax.block_until_ready(loss_b)
    ref_b = _reference(out_b, tgt_b, w_b, True, topk)
    assert jnp.allclose(loss_b, ref_b, rtol=1e-5, atol=1e-6), (loss_b, ref_b)

    print("KERNEL_OK")
</pallas_src>

<mosaic_0001>
module attributes {stable_mosaic.version = 11 : i64} {
  func.func @_ohkm_mse_kernel(%arg0: i32, %arg1: i32, %arg2: memref<2x16x256xf32, #tpu.memory_space<vmem>>, %arg3: memref<2x16x256xf32, #tpu.memory_space<vmem>>, %arg4: memref<2x16xf32, #tpu.memory_space<vmem>>, %arg5: memref<2x1xf32, #tpu.memory_space<vmem>>, %arg6: memref<2x16xf32, #tpu.memory_space<vmem>>) attributes {dimension_semantics = [#tpu.dimension_semantics<parallel>, #tpu.dimension_semantics<arbitrary>], iteration_bounds = array<i64: 1, 1>, scalar_prefetch = 0 : i64, scratch_operands = 1 : i64, tpu.core_type = #tpu.core_type<tc>, window_params = [{transform_indices = @transform_0, window_bounds = array<i64: 2, 16, 256>}, {transform_indices = @transform_1, window_bounds = array<i64: 2, 16, 256>}, {transform_indices = @transform_2, window_bounds = array<i64: 2, 16>}, {transform_indices = @transform_3, window_bounds = array<i64: 2, 1>}]} {
    %c0_i32 = arith.constant 0 : i32
    %0 = arith.cmpi eq, %arg1, %c0_i32 : i32
    %1 = arith.extui %0 : i1 to i32
    %c0_i32_0 = arith.constant 0 : i32
    %2 = arith.cmpi ne, %1, %c0_i32_0 : i32
    scf.if %2 {
      %cst_12 = arith.constant 0.000000e+00 : f32
      %14 = vector.broadcast %cst_12 : f32 to vector<2x16xf32>
      %c0_13 = arith.constant 0 : index
      %c0_14 = arith.constant 0 : index
      %15 = vector.load %arg6[%c0_13, %c0_14] : memref<2x16xf32, #tpu.memory_space<vmem>>, vector<2x16xf32>
      tpu.vector_store %arg6[%c0_13, %c0_14], %14 {strides = array<i32>} : memref<2x16xf32, #tpu.memory_space<vmem>>, vector<2x16xf32>,
    } else {
    }
    %c0 = arith.constant 0 : index
    %c0_1 = arith.constant 0 : index
    %c0_2 = arith.constant 0 : index
    %3 = vector.load %arg2[%c0, %c0_1, %c0_2] : memref<2x16x256xf32, #tpu.memory_space<vmem>>, vector<2x16x256xf32>
    %c0_3 = arith.constant 0 : index
    %c0_4 = arith.constant 0 : index
    %c0_5 = arith.constant 0 : index
    %4 = vector.load %arg3[%c0_3, %c0_4, %c0_5] : memref<2x16x256xf32, #tpu.memory_space<vmem>>, vector<2x16x256xf32>
    %5 = arith.subf %3, %4 : vector<2x16x256xf32>
    %c0_6 = arith.constant 0 : index
    %c0_7 = arith.constant 0 : index
    %6 = vector.load %arg6[%c0_6, %c0_7] : memref<2x16xf32, #tpu.memory_space<vmem>>, vector<2x16xf32>
    %7 = arith.mulf %5, %5 : vector<2x16x256xf32>
    %cst = arith.constant dense<0.000000e+00> : vector<2x16xf32>
    %8 = vector.multi_reduction <add>, %7, %cst [2] : vector<2x16x256xf32> to vector<2x16xf32>
    %9 = arith.addf %6, %8 : vector<2x16xf32>
    %c0_8 = arith.constant 0 : index
    %c0_9 = arith.constant 0 : index
    %10 = vector.load %arg6[%c0_8, %c0_9] : memref<2x16xf32, #tpu.memory_space<vmem>>, vector<2x16xf32>
    tpu.vector_store %arg6[%c0_8, %c0_9], %9 {strides = array<i32>} : memref<2x16xf32, #tpu.memory_space<vmem>>, vector<2x16xf32>,
    %c0_i32_10 = arith.constant 0 : i32
    %11 = arith.cmpi eq, %arg1, %c0_i32_10 : i32
    %12 = arith.extui %11 : i1 to i32
    %c0_i32_11 = arith.constant 0 : i32
    %13 = arith.cmpi ne, %12, %c0_i32_11 : i32
    scf.if %13 {
      %c0_12 = arith.constant 0 : index
      %c0_13 = arith.constant 0 : index
      %14 = vector.load %arg6[%c0_12, %c0_13] : memref<2x16xf32, #tpu.memory_space<vmem>>, vector<2x16xf32>
      %cst_14 = arith.constant 0.001953125 : f32
      %15 = vector.broadcast %cst_14 : f32 to vector<2x16xf32>
      %16 = arith.mulf %14, %15 : vector<2x16xf32>
      %c0_15 = arith.constant 0 : index
      %c0_16 = arith.constant 0 : index
      %17 = vector.load %arg4[%c0_15, %c0_16] : memref<2x16xf32, #tpu.memory_space<vmem>>, vector<2x16xf32>
      %18 = arith.mulf %17, %17 : vector<2x16xf32>
      %19 = arith.mulf %16, %18 : vector<2x16xf32>
      %20 = tpu.iota {dimensions = array<i32: 1>} : vector<2x16xi32>
      %cst_17 = arith.constant 0.000000e+00 : f32
      %21 = vector.broadcast %cst_17 : f32 to vector<2x1xf32>
      %cst_18 = arith.constant dense<0xFF800000> : vector<2xf32>
      %22 = vector.multi_reduction <maximumf>, %19, %cst_18 [1] : vector<2x16xf32> to vector<2xf32>
      %23 = vector.shape_cast %22 : vector<2xf32> to vector<2x1xf32>
      %24 = arith.addf %21, %23 : vector<2x1xf32>
      %25 = vector.broadcast %23 : vector<2x1xf32> to vector<2x16xf32>
      %26 = arith.cmpf oeq, %19, %25 : vector<2x16xf32>
      %c16_i32 = arith.constant 16 : i32
      %27 = vector.broadcast %c16_i32 : i32 to vector<2x16xi32>
      %28 = arith.select %26, %20, %27 : vector<2x16xi1>, vector<2x16xi32>
      %cst_19 = arith.constant dense<2147483647> : vector<2xi32>
      %29 = vector.multi_reduction <minsi>, %28, %cst_19 [1] : vector<2x16xi32> to vector<2xi32>
      %30 = vector.shape_cast %29 : vector<2xi32> to vector<2x1xi32>
      %31 = vector.broadcast %30 : vector<2x1xi32> to vector<2x16xi32>
      %32 = arith.cmpi eq, %20, %31 : vector<2x16xi32>
      %cst_20 = arith.constant 0xFF800000 : f32
      %33 = vector.broadcast %cst_20 : f32 to vector<2x16xf32>
      %34 = arith.select %32, %33, %19 : vector<2x16xi1>, vector<2x16xf32>
      %cst_21 = arith.constant dense<0xFF800000> : vector<2xf32>
      %35 = vector.multi_reduction <maximumf>, %34, %cst_21 [1] : vector<2x16xf32> to vector<2xf32>
      %36 = vector.shape_cast %35 : vector<2xf32> to vector<2x1xf32>
      %37 = arith.addf %24, %36 : vector<2x1xf32>
      %38 = vector.broadcast %36 : vector<2x1xf32> to vector<2x16xf32>
      %39 = arith.cmpf oeq, %34, %38 : vector<2x16xf32>
      %c16_i32_22 = arith.constant 16 : i32
      %40 = vector.broadcast %c16_i32_22 : i32 to vector<2x16xi32>
      %41 = arith.select %39, %20, %40 : vector<2x16xi1>, vector<2x16xi32>
      %cst_23 = arith.constant dense<2147483647> : vector<2xi32>
      %42 = vector.multi_reduction <minsi>, %41, %cst_23 [1] : vector<2x16xi32> to vector<2xi32>
      %43 = vector.shape_cast %42 : vector<2xi32> to vector<2x1xi32>
      %44 = vector.broadcast %43 : vector<2x1xi32> to vector<2x16xi32>
      %45 = arith.cmpi eq, %20, %44 : vector<2x16xi32>
      %cst_24 = arith.constant 0xFF800000 : f32
      %46 = vector.broadcast %cst_24 : f32 to vector<2x16xf32>
      %47 = arith.select %45, %46, %34 : vector<2x16xi1>, vector<2x16xf32>
      %cst_25 = arith.constant dense<0xFF800000> : vector<2xf32>
      %48 = vector.multi_reduction <maximumf>, %47, %cst_25 [1] : vector<2x16xf32> to vector<2xf32>
      %49 = vector.shape_cast %48 : vector<2xf32> to vector<2x1xf32>
      %50 = arith.addf %37, %49 : vector<2x1xf32>
      %51 = vector.broadcast %49 : vector<2x1xf32> to vector<2x16xf32>
      %52 = arith.cmpf oeq, %47, %51 : vector<2x16xf32>
      %c16_i32_26 = arith.constant 16 : i32
      %53 = vector.broadcast %c16_i32_26 : i32 to vector<2x16xi32>
      %54 = arith.select %52, %20, %53 : vector<2x16xi1>, vector<2x16xi32>
      %cst_27 = arith.constant dense<2147483647> : vector<2xi32>
      %55 = vector.multi_reduction <minsi>, %54, %cst_27 [1] : vector<2x16xi32> to vector<2xi32>
      %56 = vector.shape_cast %55 : vector<2xi32> to vector<2x1xi32>
      %57 = vector.broadcast %56 : vector<2x1xi32> to vector<2x16xi32>
      %58 = arith.cmpi eq, %20, %57 : vector<2x16xi32>
      %cst_28 = arith.constant 0xFF800000 : f32
      %59 = vector.broadcast %cst_28 : f32 to vector<2x16xf32>
      %60 = arith.select %58, %59, %47 : vector<2x16xi1>, vector<2x16xf32>
      %cst_29 = arith.constant dense<0xFF800000> : vector<2xf32>
      %61 = vector.multi_reduction <maximumf>, %60, %cst_29 [1] : vector<2x16xf32> to vector<2xf32>
      %62 = vector.shape_cast %61 : vector<2xf32> to vector<2x1xf32>
      %63 = arith.addf %50, %62 : vector<2x1xf32>
      %64 = vector.broadcast %62 : vector<2x1xf32> to vector<2x16xf32>
      %65 = arith.cmpf oeq, %60, %64 : vector<2x16xf32>
      %c16_i32_30 = arith.constant 16 : i32
      %66 = vector.broadcast %c16_i32_30 : i32 to vector<2x16xi32>
      %67 = arith.select %65, %20, %66 : vector<2x16xi1>, vector<2x16xi32>
      %cst_31 = arith.constant dense<2147483647> : vector<2xi32>
      %68 = vector.multi_reduction <minsi>, %67, %cst_31 [1] : vector<2x16xi32> to vector<2xi32>
      %69 = vector.shape_cast %68 : vector<2xi32> to vector<2x1xi32>
      %70 = vector.broadcast %69 : vector<2x1xi32> to vector<2x16xi32>
      %71 = arith.cmpi eq, %20, %70 : vector<2x16xi32>
      %cst_32 = arith.constant 0xFF800000 : f32
      %72 = vector.broadcast %cst_32 : f32 to vector<2x16xf32>
      %73 = arith.select %71, %72, %60 : vector<2x16xi1>, vector<2x16xf32>
      %cst_33 = arith.constant dense<0xFF800000> : vector<2xf32>
      %74 = vector.multi_reduction <maximumf>, %73, %cst_33 [1] : vector<2x16xf32> to vector<2xf32>
      %75 = vector.shape_cast %74 : vector<2xf32> to vector<2x1xf32>
      %76 = arith.addf %63, %75 : vector<2x1xf32>
      %77 = vector.broadcast %75 : vector<2x1xf32> to vector<2x16xf32>
      %78 = arith.cmpf oeq, %73, %77 : vector<2x16xf32>
      %c16_i32_34 = arith.constant 16 : i32
      %79 = vector.broadcast %c16_i32_34 : i32 to vector<2x16xi32>
      %80 = arith.select %78, %20, %79 : vector<2x16xi1>, vector<2x16xi32>
      %cst_35 = arith.constant dense<2147483647> : vector<2xi32>
      %81 = vector.multi_reduction <minsi>, %80, %cst_35 [1] : vector<2x16xi32> to vector<2xi32>
      %82 = vector.shape_cast %81 : vector<2xi32> to vector<2x1xi32>
      %83 = vector.broadcast %82 : vector<2x1xi32> to vector<2x16xi32>
      %84 = arith.cmpi eq, %20, %83 : vector<2x16xi32>
      %cst_36 = arith.constant 0xFF800000 : f32
      %85 = vector.broadcast %cst_36 : f32 to vector<2x16xf32>
      %86 = arith.select %84, %85, %73 : vector<2x16xi1>, vector<2x16xf32>
      %cst_37 = arith.constant dense<0xFF800000> : vector<2xf32>
      %87 = vector.multi_reduction <maximumf>, %86, %cst_37 [1] : vector<2x16xf32> to vector<2xf32>
      %88 = vector.shape_cast %87 : vector<2xf32> to vector<2x1xf32>
      %89 = arith.addf %76, %88 : vector<2x1xf32>
      %90 = vector.broadcast %88 : vector<2x1xf32> to vector<2x16xf32>
      %91 = arith.cmpf oeq, %86, %90 : vector<2x16xf32>
      %c16_i32_38 = arith.constant 16 : i32
      %92 = vector.broadcast %c16_i32_38 : i32 to vector<2x16xi32>
      %93 = arith.select %91, %20, %92 : vector<2x16xi1>, vector<2x16xi32>
      %cst_39 = arith.constant dense<2147483647> : vector<2xi32>
      %94 = vector.multi_reduction <minsi>, %93, %cst_39 [1] : vector<2x16xi32> to vector<2xi32>
      %95 = vector.shape_cast %94 : vector<2xi32> to vector<2x1xi32>
      %96 = vector.broadcast %95 : vector<2x1xi32> to vector<2x16xi32>
      %97 = arith.cmpi eq, %20, %96 : vector<2x16xi32>
      %cst_40 = arith.constant 0xFF800000 : f32
      %98 = vector.broadcast %cst_40 : f32 to vector<2x16xf32>
      %99 = arith.select %97, %98, %86 : vector<2x16xi1>, vector<2x16xf32>
      %cst_41 = arith.constant dense<0xFF800000> : vector<2xf32>
      %100 = vector.multi_reduction <maximumf>, %99, %cst_41 [1] : vector<2x16xf32> to vector<2xf32>
      %101 = vector.shape_cast %100 : vector<2xf32> to vector<2x1xf32>
      %102 = arith.addf %89, %101 : vector<2x1xf32>
      %103 = vector.broadcast %101 : vector<2x1xf32> to vector<2x16xf32>
      %104 = arith.cmpf oeq, %99, %103 : vector<2x16xf32>
      %c16_i32_42 = arith.constant 16 : i32
      %105 = vector.broadcast %c16_i32_42 : i32 to vector<2x16xi32>
      %106 = arith.select %104, %20, %105 : vector<2x16xi1>, vector<2x16xi32>
      %cst_43 = arith.constant dense<2147483647> : vector<2xi32>
      %107 = vector.multi_reduction <minsi>, %106, %cst_43 [1] : vector<2x16xi32> to vector<2xi32>
      %108 = vector.shape_cast %107 : vector<2xi32> to vector<2x1xi32>
      %109 = vector.broadcast %108 : vector<2x1xi32> to vector<2x16xi32>
      %110 = arith.cmpi eq, %20, %109 : vector<2x16xi32>
      %cst_44 = arith.constant 0xFF800000 : f32
      %111 = vector.broadcast %cst_44 : f32 to vector<2x16xf32>
      %112 = arith.select %110, %111, %99 : vector<2x16xi1>, vector<2x16xf32>
      %cst_45 = arith.constant dense<0xFF800000> : vector<2xf32>
      %113 = vector.multi_reduction <maximumf>, %112, %cst_45 [1] : vector<2x16xf32> to vector<2xf32>
      %114 = vector.shape_cast %113 : vector<2xf32> to vector<2x1xf32>
      %115 = arith.addf %102, %114 : vector<2x1xf32>
      %c0_46 = arith.constant 0 : index
      %c0_47 = arith.constant 0 : index
      %116 = vector.load %arg5[%c0_46, %c0_47] : memref<2x1xf32, #tpu.memory_space<vmem>>, vector<2x1xf32>
      tpu.vector_store %arg5[%c0_46, %c0_47], %115 {strides = array<i32>} : memref<2x1xf32, #tpu.memory_space<vmem>>, vector<2x1xf32>,
    } else {
    }
    return
  }
  func.func @transform_0(%arg0: i32, %arg1: i32) -> (i32, i32, i32) {
    %c0_i32 = arith.constant 0 : i32
    %c0_i32_0 = arith.constant 0 : i32
    return %arg0, %c0_i32, %arg1 : i32, i32, i32
  }
  func.func @transform_1(%arg0: i32, %arg1: i32) -> (i32, i32, i32) {
    %c0_i32 = arith.constant 0 : i32
    %c0_i32_0 = arith.constant 0 : i32
    return %arg0, %c0_i32, %arg1 : i32, i32, i32
  }
  func.func @transform_2(%arg0: i32, %arg1: i32) -> (i32, i32) {
    %c0_i32 = arith.constant 0 : i32
    %c0_i32_0 = arith.constant 0 : i32
    return %arg0, %c0_i32 : i32, i32
  }
  func.func @transform_3(%arg0: i32, %arg1: i32) -> (i32, i32) {
    %c0_i32 = arith.constant 0 : i32
    %c0_i32_0 = arith.constant 0 : i32
    return %arg0, %c0_i32 : i32, i32
  }
}

</mosaic_0001>

<llo_original>
// kernel: tpu_custom_call.1
$region0: #{tpu_custom_call.1}
  #allocation0 [shape = 'u32[]', space=smem, size = 0x4, offset = 0x4, fixed_abs, tag = 'smem constant byte address 0x4 - core index']
  #allocation1 [shape = 'u32[144,128]{1,0:T(1,128)}', space=vmem, size = 0x12000, scoped, tag = 'internal scratch']
  #allocation2 [shape = 'f32[2,16]{1,0:T(2,128)}', space=vmem, size = 0x400, scoped, tag = 'scratch operand']
  %s0 = inlined_call_operand.hbm [shape: f32[2,16,256], index: 0, kind: input, shape index: {}]
  %s1 = inlined_call_operand.hbm [shape: f32[2,16,256], index: 1, kind: input, shape index: {}]
  %s2 = inlined_call_operand.vmem [shape: f32[2,16], index: 2, kind: input, shape index: {}]
  %s3 = inlined_call_operand.vmem [shape: f32[2,1], index: 3, kind: output, shape index: {}]
  %s4 = sld [smem:[#allocation0]]
  $region38: #{tpu_custom_call.1} parent=0
    _
  %s6 = ssub.s32 1, %s4
  %s7 = scalar_select 0, %s6, %s4
  $region1: #{tpu_custom_call.1} parent=0
    #allocation3 [shape = 'u8[32768]{0}', space=vmem, size = 0x8000, scoped, tag = 'input window, operand 0, single buffered']
    #allocation4 [shape = 's32[1]{0}', space=sflag, size = 0x4, scoped, tag = 'scoped memory for tpu_custom_call.1']
    #allocation5 [shape = 'u8[32768]{0}', space=vmem, size = 0x8000, scoped, tag = 'input window, operand 1, single buffered']
    #allocation6 [shape = 's32[1]{0}', space=sflag, size = 0x4, scoped, tag = 'scoped memory for tpu_custom_call.1']
    %8 = vsyncpa [#allocation4], 0
    %9 = vsyncpa [#allocation6], 0
    // Predicated region
    $region2: #{tpu_custom_call.1} parent=1 // pred_check
      _
    $region3: #{tpu_custom_call.1} parent=1 // pred_check_branch
      %11 = sbr.rel (0) target = $region5
    $region4: #{tpu_custom_call.1} parent=1 // pred_region
      %s13 = ssub.s32 1024, 1024
      %14 = vsyncadd [#allocation4], %s13
      %s15 = sshll.u32 [#allocation3], 4
      %s16 = int_to_ptr.vmem [resolvable:$true] %s15
      %21 = dma.hbm_to_vmem [thread:$0]  %s0, 1024, %s16, [#allocation4], 256, 256, 16
    $region5: #{tpu_custom_call.1} parent=1 // pred_fallthru
      _
    // Predicated region
    $region6: #{tpu_custom_call.1} parent=1 // pred_check
      _
    $region7: #{tpu_custom_call.1} parent=1 // pred_check_branch
      %23 = sbr.rel (0) target = $region9
    $region8: #{tpu_custom_call.1} parent=1 // pred_region
      %s25 = ssub.s32 1024, 1024
      %26 = vsyncadd [#allocation6], %s25
      %s27 = sshll.u32 [#allocation5], 4
      %s28 = int_to_ptr.vmem [resolvable:$true] %s27
      %33 = dma.hbm_to_vmem [thread:$0]  %s1, 1024, %s28, [#allocation6], 256, 256, 16
    $region9: #{tpu_custom_call.1} parent=1 // pred_fallthru
      _
    // Predicated region
    $region10: #{tpu_custom_call.1} parent=1 // pred_check
      _
    $region11: #{tpu_custom_call.1} parent=1 // pred_check_branch
      %35 = sbr.rel (0) target = $region13
    $region12: #{tpu_custom_call.1} parent=1 // pred_region
      _
    $region13: #{tpu_custom_call.1} parent=1 // pred_fallthru
      _
    // Predicated region
    $region14: #{tpu_custom_call.1} parent=1 // pred_check
      _
    $region15: #{tpu_custom_call.1} parent=1 // pred_check_branch
      %37 = sbr.rel (0) target = $region17
    $region16: #{tpu_custom_call.1} parent=1 // pred_region
      %38 = dma.done [#allocation4], 1024
    $region17: #{tpu_custom_call.1} parent=1 // pred_fallthru
      _
    // Predicated region
    $region18: #{tpu_custom_call.1} parent=1 // pred_check
      _
    $region19: #{tpu_custom_call.1} parent=1 // pred_check_branch
      %40 = sbr.rel (0) target = $region21
    $region20: #{tpu_custom_call.1} parent=1 // pred_region
      %41 = dma.done [#allocation6], 1024
    $region21: #{tpu_custom_call.1} parent=1 // pred_fallthru
      _
    %p42 = scmp.eq.s32.totalorder 0, 0
    // Predicated region
    $region22: #{tpu_custom_call.1} parent=1 // pred_check
      %p43 = pneg %p42
    $region23: #{tpu_custom_call.1} parent=1 // pred_check_branch
      %45 = sbr.rel (%p43) target = $region25
    $region24: #{tpu_custom_call.1} parent=1 // pred_region
      %vm46 = vcmask 123904
      %47 = vst.msk [vmem:[#allocation2] sm:$0x3] %vm46, 0.0
    $region25: #{tpu_custom_call.1} parent=1 // pred_fallthru
      _
    %v48 = vld [vmem:[#allocation3] sm:$0xff]
    %v49 = vld [vmem:[#allocation3 + $0x8] sm:$0xff]
    %v50 = vld [vmem:[#allocation3 + $0x10] sm:$0xff]
    %v51 = vld [vmem:[#allocation3 + $0x18] sm:$0xff]
    %v52 = vld [vmem:[#allocation3 + $0x20] sm:$0xff]
    %v53 = vld [vmem:[#allocation3 + $0x28] sm:$0xff]
    %v54 = vld [vmem:[#allocation3 + $0x30] sm:$0xff]
    %v55 = vld [vmem:[#allocation3 + $0x38] sm:$0xff]
    %v56 = vld [vmem:[#allocation5] sm:$0xff]
    %v57 = vld [vmem:[#allocation5 + $0x8] sm:$0xff]
    %v58 = vld [vmem:[#allocation5 + $0x10] sm:$0xff]
    %v59 = vld [vmem:[#allocation5 + $0x18] sm:$0xff]
    %v60 = vld [vmem:[#allocation5 + $0x20] sm:$0xff]
    %v61 = vld [vmem:[#allocation5 + $0x28] sm:$0xff]
    %v62 = vld [vmem:[#allocation5 + $0x30] sm:$0xff]
    %v63 = vld [vmem:[#allocation5 + $0x38] sm:$0xff]
    %v64 = vsub.f32 %v48, %v56
    %v65 = vsub.f32 %v49, %v57
    %v66 = vsub.f32 %v50, %v58
    %v67 = vsub.f32 %v51, %v59
    %v68 = vsub.f32 %v52, %v60
    %v69 = vsub.f32 %v53, %v61
    %v70 = vsub.f32 %v54, %v62
    %v71 = vsub.f32 %v55, %v63
    %v72 = vld [vmem:[#allocation2] sm:$0x3]
    %v73 = vmul.f32 %v64, %v64
    %v74 = vmul.f32 %v65, %v65
    %v75 = vmul.f32 %v66, %v66
    %v76 = vmul.f32 %v67, %v67
    %v77 = vmul.f32 %v68, %v68
    %v78 = vmul.f32 %v69, %v69
    %v79 = vmul.f32 %v70, %v70
    %v80 = vmul.f32 %v71, %v71
    %v81 = vadd.f32 %v73, %v74
    %82 = vadd.xlane.f32.xlu0 %v81
    %v83 = vpop.xlane.xlu0 %82
    %v84 = vadd.f32 %v75, %v76
    %85 = vadd.xlane.f32.xlu0 %v84
    %v86 = vpop.xlane.xlu0 %85
    %v87 = vadd.f32 %v77, %v78
    %88 = vadd.xlane.f32.xlu0 %v87
    %v89 = vpop.xlane.xlu0 %88
    %v90 = vadd.f32 %v79, %v80
    %91 = vadd.xlane.f32.xlu0 %v90
    %v92 = vpop.xlane.xlu0 %91
    %v97 = vlaneseq
    %v98 = vand.u32 %v97, 127
    %v99 = vlaneseq
    %v100 = vshrl.u32 %v99, 7
    %v101 = vsub.s32 %v98, %v100
    %v102 = vrot.slane %v83, %v101
    %v103 = vadd.s32 %v98, 4294967288
    %v104 = vlaneseq
    %v105 = vshrl.u32 %v104, 7
    %v106 = vsub.s32 %v103, %v105
    %v107 = vrot.slane %v86, %v106
    %vm108 = vcmask 130112
    %v109 = vsel %vm108, %v107, %v102
    %v110 = vlaneseq
    %v111 = vshrl.u32 %v110, 7
    %v112 = vsub.s32 %v98, %v111
    %v113 = vrot.slane %v89, %v112
    %v114 = vlaneseq
    %v115 = vshrl.u32 %v114, 7
    %v116 = vsub.s32 %v103, %v115
    %v117 = vrot.slane %v92, %v116
    %v118 = vsel %vm108, %v117, %v113
    %vm119 = vcmask 1041409
    %v120 = vsel %vm119, %v118, %v109
    %v122 = vadd.f32 %v72, %v120
    %vm123 = vcmask 123904
    %124 = vst.msk [vmem:[#allocation2] sm:$0x3] %vm123, %v122
    // Predicated region
    $region26: #{tpu_custom_call.1} parent=1 // pred_check
      %p125 = pneg %p42
    $region27: #{tpu_custom_call.1} parent=1 // pred_check_branch
      %127 = sbr.rel (%p125) target = $region29
    $region28: #{tpu_custom_call.1} parent=1 // pred_region
      %v128 = vld [vmem:[#allocation2] sm:$0x3]
      %v129 = vmul.f32 %v128, 0.001953125
      %v130 = vld [vmem:[%s2] sm:$0x3]
      %v131 = vmul.f32 %v130, %v130
      %v132 = vmul.f32 %v129, %v131
      %v133 = vsel %vm123, %v132, -inf
      %134 = vmax.xlane.f32.xlu0 %v133
      %v135 = vpop.xlane.xlu0 %134
      %v136 = vadd.f32 %v135, 0.0
      %vm137 = vcmp.eq.f32.partialorder %v132, %v135
      %v138 = vsel %vm137, %v98, 16
      %v139 = vsel %vm123, %v138, 2147483647
      %v140 = vand.u32 %v139, 65535
      %v141 = vshra.s32 %v139, 16
      %v142 = vcvt.s32.f32 %v140
      %v143 = vcvt.s32.f32 %v141
      %144 = vmin.xlane.f32.xlu0 %v143
      %v145 = vpop.xlane.xlu0 %144
      %vm146 = vcmp.eq.f32.partialorder %v143, %v145
      %v147 = vsel %vm146, %v142, inf
      %148 = vmin.xlane.f32.xlu0 %v147
      %v149 = vpop.xlane.xlu0 %148
      %v150 = vcvt.f32.s32 %v149
      %v151 = vcvt.f32.s32 %v145
      %v152 = vshll.u32 %v151, 16
      %v153 = vadd.s32 %v152, %v150
      %vm154 = vcmp.eq.s32.totalorder %v98, %v153
      %v155 = vsel %vm154, -inf, %v132
      %v156 = vsel %vm123, %v155, -inf
      %157 = vmax.xlane.f32.xlu0 %v156
      %v158 = vpop.xlane.xlu0 %157
      %v159 = vadd.f32 %v136, %v158
      %vm160 = vcmp.eq.f32.partialorder %v155, %v158
      %v161 = vsel %vm160, %v98, 16
      %v162 = vsel %vm123, %v161, 2147483647
      %v163 = vand.u32 %v162, 65535
      %v164 = vshra.s32 %v162, 16
      %v165 = vcvt.s32.f32 %v163
      %v166 = vcvt.s32.f32 %v164
      %167 = vmin.xlane.f32.xlu0 %v166
      %v168 = vpop.xlane.xlu0 %167
      %vm169 = vcmp.eq.f32.partialorder %v166, %v168
      %v170 = vsel %vm169, %v165, inf
      %171 = vmin.xlane.f32.xlu0 %v170
      %v172 = vpop.xlane.xlu0 %171
      %v173 = vcvt.f32.s32 %v172
      %v174 = vcvt.f32.s32 %v168
      %v175 = vshll.u32 %v174, 16
      %v176 = vadd.s32 %v175, %v173
      %vm177 = vcmp.eq.s32.totalorder %v98, %v176
      %v178 = vsel %vm177, -inf, %v155
      %v179 = vsel %vm123, %v178, -inf
      %180 = vmax.xlane.f32.xlu0 %v179
      %v181 = vpop.xlane.xlu0 %180
      %v182 = vadd.f32 %v159, %v181
      %vm183 = vcmp.eq.f32.partialorder %v178, %v181
      %v184 = vsel %vm183, %v98, 16
      %v185 = vsel %vm123, %v184, 2147483647
      %v186 = vand.u32 %v185, 65535
      %v187 = vshra.s32 %v185, 16
      %v188 = vcvt.s32.f32 %v186
      %v189 = vcvt.s32.f32 %v187
      %190 = vmin.xlane.f32.xlu0 %v189
      %v191 = vpop.xlane.xlu0 %190
      %vm192 = vcmp.eq.f32.partialorder %v189, %v191
      %v193 = vsel %vm192, %v188, inf
      %194 = vmin.xlane.f32.xlu0 %v193
      %v195 = vpop.xlane.xlu0 %194
      %v196 = vcvt.f32.s32 %v195
      %v197 = vcvt.f32.s32 %v191
      %v198 = vshll.u32 %v197, 16
      %v199 = vadd.s32 %v198, %v196
      %vm200 = vcmp.eq.s32.totalorder %v98, %v199
      %v201 = vsel %vm200, -inf, %v178
      %v202 = vsel %vm123, %v201, -inf
      %203 = vmax.xlane.f32.xlu0 %v202
      %v204 = vpop.xlane.xlu0 %203
      %v205 = vadd.f32 %v182, %v204
      %vm206 = vcmp.eq.f32.partialorder %v201, %v204
      %v207 = vsel %vm206, %v98, 16
      %v208 = vsel %vm123, %v207, 2147483647
      %v209 = vand.u32 %v208, 65535
      %v210 = vshra.s32 %v208, 16
      %v211 = vcvt.s32.f32 %v209
      %v212 = vcvt.s32.f32 %v210
      %213 = vmin.xlane.f32.xlu0 %v212
      %v214 = vpop.xlane.xlu0 %213
      %vm215 = vcmp.eq.f32.partialorder %v212, %v214
      %v216 = vsel %vm215, %v211, inf
      %217 = vmin.xlane.f32.xlu0 %v216
      %v218 = vpop.xlane.xlu0 %217
      %v219 = vcvt.f32.s32 %v218
      %v220 = vcvt.f32.s32 %v214
      %v221 = vshll.u32 %v220, 16
      %v222 = vadd.s32 %v221, %v219
      %vm223 = vcmp.eq.s32.totalorder %v98, %v222
      %v224 = vsel %vm223, -inf, %v201
      %v225 = vsel %vm123, %v224, -inf
      %226 = vmax.xlane.f32.xlu0 %v225
      %v227 = vpop.xlane.xlu0 %226
      %v228 = vadd.f32 %v205, %v227
      %vm229 = vcmp.eq.f32.partialorder %v224, %v227
      %v230 = vsel %vm229, %v98, 16
      %v231 = vsel %vm123, %v230, 2147483647
      %v232 = vand.u32 %v231, 65535
      %v233 = vshra.s32 %v231, 16
      %v234 = vcvt.s32.f32 %v232
      %v235 = vcvt.s32.f32 %v233
      %236 = vmin.xlane.f32.xlu0 %v235
      %v237 = vpop.xlane.xlu0 %236
      %vm238 = vcmp.eq.f32.partialorder %v235, %v237
      %v239 = vsel %vm238, %v234, inf
      %240 = vmin.xlane.f32.xlu0 %v239
      %v241 = vpop.xlane.xlu0 %240
      %v242 = vcvt.f32.s32 %v241
      %v243 = vcvt.f32.s32 %v237
      %v244 = vshll.u32 %v243, 16
      %v245 = vadd.s32 %v244, %v242
      %vm246 = vcmp.eq.s32.totalorder %v98, %v245
      %v247 = vsel %vm246, -inf, %v224
      %v248 = vsel %vm123, %v247, -inf
      %249 = vmax.xlane.f32.xlu0 %v248
      %v250 = vpop.xlane.xlu0 %249
      %v251 = vadd.f32 %v228, %v250
      %vm252 = vcmp.eq.f32.partialorder %v247, %v250
      %v253 = vsel %vm252, %v98, 16
      %v254 = vsel %vm123, %v253, 2147483647
      %v255 = vand.u32 %v254, 65535
      %v256 = vshra.s32 %v254, 16
      %v257 = vcvt.s32.f32 %v255
      %v258 = vcvt.s32.f32 %v256
      %259 = vmin.xlane.f32.xlu0 %v258
      %v260 = vpop.xlane.xlu0 %259
      %vm261 = vcmp.eq.f32.partialorder %v258, %v260
      %v262 = vsel %vm261, %v257, inf
      %263 = vmin.xlane.f32.xlu0 %v262
      %v264 = vpop.xlane.xlu0 %263
      %v265 = vcvt.f32.s32 %v264
      %v266 = vcvt.f32.s32 %v260
      %v267 = vshll.u32 %v266, 16
      %v268 = vadd.s32 %v267, %v265
      %vm269 = vcmp.eq.s32.totalorder %v98, %v268
      %v270 = vsel %vm269, -inf, %v247
      %v271 = vsel %vm123, %v270, -inf
      %272 = vmax.xlane.f32.xlu0 %v271
      %v273 = vpop.xlane.xlu0 %272
      %v274 = vadd.f32 %v251, %v273
      %vm275 = vcmp.eq.f32.partialorder %v270, %v273
      %v276 = vsel %vm275, %v98, 16
      %v277 = vsel %vm123, %v276, 2147483647
      %v278 = vand.u32 %v277, 65535
      %v279 = vshra.s32 %v277, 16
      %v280 = vcvt.s32.f32 %v278
      %v281 = vcvt.s32.f32 %v279
      %282 = vmin.xlane.f32.xlu0 %v281
      %v283 = vpop.xlane.xlu0 %282
      %vm284 = vcmp.eq.f32.partialorder %v281, %v283
      %v285 = vsel %vm284, %v280, inf
      %286 = vmin.xlane.f32.xlu0 %v285
      %v287 = vpop.xlane.xlu0 %286
      %v288 = vcvt.f32.s32 %v287
      %v289 = vcvt.f32.s32 %v283
      %v290 = vshll.u32 %v289, 16
      %v291 = vadd.s32 %v290, %v288
      %vm292 = vcmp.eq.s32.totalorder %v98, %v291
      %v293 = vsel %vm292, -inf, %v270
      %v294 = vsel %vm123, %v293, -inf
      %295 = vmax.xlane.f32.xlu0 %v294
      %v296 = vpop.xlane.xlu0 %295
      %v297 = vadd.f32 %v274, %v296
      %vm298 = vcmask 1024
      %299 = vst.msk [vmem:[%s3] sm:$0x3] %vm298, %v297
    $region29: #{tpu_custom_call.1} parent=1 // pred_fallthru
      _
    // Predicated region
    $region30: #{tpu_custom_call.1} parent=1 // pred_check
      _
    $region31: #{tpu_custom_call.1} parent=1 // pred_check_branch
      %301 = sbr.rel (0) target = $region33
    $region32: #{tpu_custom_call.1} parent=1 // pred_region
      _
    $region33: #{tpu_custom_call.1} parent=1 // pred_fallthru
      _
    // Predicated region
    $region34: #{tpu_custom_call.1} parent=1 // pred_check
      _
    $region35: #{tpu_custom_call.1} parent=1 // pred_check_branch
      %303 = sbr.rel (0) target = $region37
    $region36: #{tpu_custom_call.1} parent=1 // pred_region
      _
    $region37: #{tpu_custom_call.1} parent=1 // pred_fallthru
      _
    %304 = vsyncpa [#allocation4], 1
    %305 = vsyncpa [#allocation6], 1

</llo_original>
